<compile_context>
chip_gen: v5e
topology: v5e:2x2
jax: 0.10.0
libtpu: 0.0.40
codegen_flags: <defaults>
</compile_context>

<pallas_src>
import functools

import jax
import jax.numpy as jnp
from jax import lax
from jax.experimental import pallas as pl
from jax.experimental.pallas import tpu as pltpu

LANE = 128
NEG_BIG = -1e30          # Python float: inlined literal, never a captured const
NEG_THRESH = -1e29


def _round_up(x, m):
    return ((x + m - 1) // m) * m


def _pad2d(a, rows, cols, dtype=None):
    dtype = a.dtype if dtype is None else dtype
    out = jnp.zeros((rows, cols), dtype)
    return out.at[: a.shape[0], : a.shape[1]].set(a.astype(dtype))


# ----------------------------------------------------------------------------
# Kernel 1: per-layer feature transform  HW = (d^-1/2 col-scale) * (X @ W)
# ----------------------------------------------------------------------------
def _xw_kernel(x_ref, w_ref, dis_ref, hw_ref):
    hw = jnp.dot(x_ref[...], w_ref[...], preferred_element_type=jnp.float32)
    hw_ref[...] = (hw * dis_ref[...]).astype(hw_ref.dtype)


def _xw(x, w_bf16, dis, *, tm):
    n_pad, f_pad = x.shape
    c_pad = w_bf16.shape[1]
    return pl.pallas_call(
        _xw_kernel,
        out_shape=jax.ShapeDtypeStruct((n_pad, c_pad), jnp.bfloat16),
        grid_spec=pltpu.PrefetchScalarGridSpec(
            num_scalar_prefetch=0,
            grid=(n_pad // tm,),
            in_specs=[
                pl.BlockSpec((tm, f_pad), lambda i: (i, 0)),       # X (bf16)
                pl.BlockSpec((f_pad, c_pad), lambda i: (0, 0)),    # W (bf16)
                pl.BlockSpec((tm, 1), lambda i: (i, 0)),           # d^-1/2 (f32)
            ],
            out_specs=pl.BlockSpec((tm, c_pad), lambda i: (i, 0)),
        ),
        compiler_params=pltpu.CompilerParams(
            dimension_semantics=("parallel",)),
    )(x, w_bf16, dis)


# ----------------------------------------------------------------------------
# Kernel 2: propagation  Z = d^-1/2_row * (A_int @ HW) + b, relu, fused JK
# ----------------------------------------------------------------------------
def _prop_kernel(has_jk, tk, a_ref, hw_ref, b_ref, dis_ref, *rest):
    if has_jk:
        jk_ref, h_out_ref, aux_out_ref, acc_ref = rest
    else:
        jk_ref = None
        h_out_ref, aux_out_ref, acc_ref = rest

    k = pl.program_id(1)
    nk = pl.num_programs(1)

    @pl.when(k == 0)
    def _():
        acc_ref[...] = jnp.zeros_like(acc_ref)

    # HW is pinned in VMEM (constant index_map); slice the k-th row chunk.
    start = pl.multiple_of(k * tk, tk)
    acc_ref[...] += jnp.dot(a_ref[...], hw_ref[pl.ds(start, tk), :],
                            preferred_element_type=jnp.float32)

    @pl.when(k == nk - 1)
    def _():
        z = acc_ref[...] * dis_ref[...] + b_ref[...]   # f32 row scale + bias
        z = jnp.maximum(z, 0.0)                        # relu (dropout=id, eval)
        h_out_ref[...] = z.astype(h_out_ref.dtype)     # bf16 input of next layer
        if has_jk:
            aux_out_ref[...] = jnp.maximum(jk_ref[...], z)   # running JK-max
        else:
            aux_out_ref[...] = z                             # 'cat': layer output


def _prop(a_bf16, hw, bias, dis, jk_prev, *, tm, tk):
    n_pad = a_bf16.shape[0]
    c_pad = hw.shape[1]
    has_jk = jk_prev is not None
    kernel = functools.partial(_prop_kernel, has_jk, tk)

    in_specs = [
        pl.BlockSpec((tm, tk), lambda i, k: (i, k)),         # A (bf16, integer)
        pl.BlockSpec((n_pad, c_pad), lambda i, k: (0, 0)),   # HW pinned in VMEM
        pl.BlockSpec((1, c_pad), lambda i, k: (0, 0)),       # bias (f32)
        pl.BlockSpec((tm, 1), lambda i, k: (i, 0)),          # row d^-1/2 (f32)
    ]
    inputs = [a_bf16, hw, bias, dis]
    if has_jk:
        in_specs.append(pl.BlockSpec((tm, c_pad), lambda i, k: (i, 0)))
        inputs.append(jk_prev)

    return pl.pallas_call(
        kernel,
        out_shape=(jax.ShapeDtypeStruct((n_pad, c_pad), jnp.bfloat16),
                   jax.ShapeDtypeStruct((n_pad, c_pad), jnp.float32)),
        grid_spec=pltpu.PrefetchScalarGridSpec(
            num_scalar_prefetch=0,
            grid=(n_pad // tm, n_pad // tk),
            in_specs=in_specs,
            out_specs=[pl.BlockSpec((tm, c_pad), lambda i, k: (i, 0)),
                       pl.BlockSpec((tm, c_pad), lambda i, k: (i, 0))],
            scratch_shapes=[pltpu.VMEM((tm, c_pad), jnp.float32)],
        ),
        compiler_params=pltpu.CompilerParams(
            dimension_semantics=("parallel", "arbitrary")),
    )(*inputs)


# ----------------------------------------------------------------------------
# Kernel 3: global_max_pool (batch-id compare mask) + MLP head
# ----------------------------------------------------------------------------
def _pool_head_kernel(hjk_ref, bid_ref, wlin_ref, blin_ref, wout_ref, bout_ref,
                      out_ref, pooled_ref):
    i = pl.program_id(0)
    nb = pl.num_programs(0)

    @pl.when(i == 0)
    def _():
        pooled_ref[...] = jnp.full_like(pooled_ref, NEG_BIG)

    h = hjk_ref[...]                          # [tm, Cjk_pad] f32
    bid = bid_ref[...]                        # [tm, 1]       int32 (-1 = padded)
    g_pad = pooled_ref.shape[0]
    tm = h.shape[0]
    giota = lax.broadcasted_iota(jnp.int32, (g_pad, tm, 1), 0)
    match = bid[None, :, :] == giota          # [G_pad, tm, 1] bool
    masked = jnp.where(match, h[None, :, :], NEG_BIG)
    pooled_ref[...] = jnp.maximum(pooled_ref[...], jnp.max(masked, axis=1))

    @pl.when(i == nb - 1)
    def _():
        pooled = pooled_ref[...]
        # Padded graph rows matched no node: clear them so -1e30 never enters
        # the head matmuls (overflow safety); they are sliced off outside.
        pooled = jnp.where(pooled > NEG_THRESH, pooled, 0.0)
        z = jnp.dot(pooled, wlin_ref[...],
                    preferred_element_type=jnp.float32) + blin_ref[...]
        z = jnp.maximum(z, 0.0)
        out_ref[...] = jnp.dot(z, wout_ref[...],
                               preferred_element_type=jnp.float32) + bout_ref[...]


def _pool_head(hjk, bid, wlin, blin, wout, bout, *, tm, g_pad):
    n_pad, cjk_pad = hjk.shape
    lin_pad = wlin.shape[1]
    out_pad = wout.shape[1]
    return pl.pallas_call(
        _pool_head_kernel,
        out_shape=jax.ShapeDtypeStruct((g_pad, out_pad), jnp.float32),
        grid_spec=pltpu.PrefetchScalarGridSpec(
            num_scalar_prefetch=0,
            grid=(n_pad // tm,),
            in_specs=[
                pl.BlockSpec((tm, cjk_pad), lambda i: (i, 0)),      # JK features
                pl.BlockSpec((tm, 1), lambda i: (i, 0)),            # batch ids
                pl.BlockSpec((cjk_pad, lin_pad), lambda i: (0, 0)),
                pl.BlockSpec((1, lin_pad), lambda i: (0, 0)),
                pl.BlockSpec((lin_pad, out_pad), lambda i: (0, 0)),
                pl.BlockSpec((1, out_pad), lambda i: (0, 0)),
            ],
            out_specs=pl.BlockSpec((g_pad, out_pad), lambda i: (0, 0)),
            scratch_shapes=[pltpu.VMEM((g_pad, cjk_pad), jnp.float32)],
        ),
        compiler_params=pltpu.CompilerParams(
            dimension_semantics=("arbitrary",)),
    )(hjk, bid, wlin, blin, wout, bout)


# ----------------------------------------------------------------------------
# Wrapper: padding / unnormalized adjacency / scales / param plumbing
# ----------------------------------------------------------------------------
def jk_forward(x, edge_index, batch, params, *, num_graphs,
               aggregation_method="max"):
    """x: [N, F_in] f32, edge_index: [2, E] i32, batch: [N] i32 (jit-friendly)."""
    if aggregation_method not in ("max", "cat"):
        raise NotImplementedError("only 'max' and 'cat' JK aggregation")
    n, f_in = x.shape
    conv_params = params["conv"]
    num_layers = len(conv_params)
    c = conv_params[0][0].shape[1]
    wlin, blin = params["lin"]
    wout, bout = params["out"]
    lin_size = wlin.shape[1]
    out_size = wout.shape[1]
    cat = aggregation_method == "cat"

    # ---- static padded sizes / tiles ---------------------------------------
    f_pad0 = _round_up(f_in, LANE)
    c_pad = _round_up(c, LANE)
    lin_pad = _round_up(lin_size, LANE)
    out_pad = _round_up(out_size, LANE)
    g_pad = _round_up(num_graphs, 8)
    if n <= 512:
        n_pad = _round_up(n, 8)
        tm = tk = n_pad                     # single full-array block
    else:
        tm = tk = 512                       # 512-row tiles: ~85% HBM roofline
        n_pad = _round_up(n, 512)
    tm_pool = n_pad if n_pad <= 512 else 512

    # ---- UNNORMALIZED adjacency + self loops (exact small ints in bf16) ----
    src, dst = edge_index[0], edge_index[1]
    adj = jnp.zeros((n_pad, n_pad), jnp.float32)
    adj = adj.at[dst, src].add(1.0)                     # duplicates accumulate
    adj = adj + jnp.eye(n_pad, dtype=jnp.float32)       # self loops
    deg = jnp.sum(adj, axis=1)
    dis = jnp.where(deg > 0, lax.rsqrt(deg), 0.0).astype(jnp.float32)
    dis = dis.reshape(n_pad, 1)                         # f32 d^-1/2, applied in-kernel
    a_bf16 = adj.astype(jnp.bfloat16)                   # exact (integer counts)

    # ---- per-node graph ids (padded nodes -> -1, never match a graph) ------
    bid = jnp.full((n_pad, 1), -1, jnp.int32).at[:n, 0].set(batch.astype(jnp.int32))

    # ---- lane-padded parameters (W cast to bf16 once, here) -----------------
    conv_padded = []
    f_prev = f_pad0
    for w, b in conv_params:
        conv_padded.append((_pad2d(w, f_prev, c_pad, jnp.bfloat16),
                            _pad2d(b, 1, c_pad, jnp.float32)))
        f_prev = c_pad

    cjk_pad = c_pad * num_layers if cat else c_pad
    wlin_pad = jnp.zeros((cjk_pad, lin_pad), jnp.float32)
    if cat:
        for l in range(num_layers):
            wlin_pad = wlin_pad.at[l * c_pad:l * c_pad + c, :lin_size].set(
                wlin[l * c:(l + 1) * c, :])
    else:
        wlin_pad = wlin_pad.at[:c, :lin_size].set(wlin)
    blin_pad = _pad2d(blin, 1, lin_pad, jnp.float32)
    wout_pad = _pad2d(wout, lin_pad, out_pad, jnp.float32)
    bout_pad = _pad2d(bout, 1, out_pad, jnp.float32)

    # ---- GCN layers: HW kernel + A-propagation kernel (fused relu/JK) -------
    h = _pad2d(x, n_pad, f_pad0, jnp.bfloat16)
    jk = None if cat else jnp.full((n_pad, c_pad), NEG_BIG, jnp.float32)
    cat_parts = []
    for w_bf, b_f32 in conv_padded:
        hw = _xw(h, w_bf, dis, tm=tm)                   # col-scaled X @ W (bf16)
        h, aux = _prop(a_bf16, hw, b_f32, dis, jk, tm=tm, tk=tk)
        if cat:
            cat_parts.append(aux)                       # layer output (f32)
        else:
            jk = aux                                    # running JK max (f32)

    hjk = jnp.concatenate(cat_parts, axis=-1) if cat else jk

    # ---- global_max_pool + MLP head -----------------------------------------
    out_padded = _pool_head(hjk, bid, wlin_pad, blin_pad, wout_pad, bout_pad,
                            tm=tm_pool, g_pad=g_pad)
    return out_padded[:num_graphs, :out_size]


# ----------------------------------------------------------------------------
# Pure-JAX reference (f32, dense) for validation
# ----------------------------------------------------------------------------
def jk_reference(x, edge_index, batch, params, *, num_graphs, aggregation_method):
    n = x.shape[0]
    src, dst = edge_index[0], edge_index[1]
    adj = jnp.zeros((n, n), jnp.float32).at[dst, src].add(1.0) + jnp.eye(n)
    deg = adj.sum(1)
    dis = jnp.where(deg > 0, 1.0 / jnp.sqrt(deg), 0.0)
    a_hat = dis[:, None] * adj * dis[None, :]
    h = x
    xs = []
    for w, b in params["conv"]:
        h = jnp.maximum(a_hat @ (h @ w) + b, 0.0)
        xs.append(h)
    if aggregation_method == "cat":
        hjk = jnp.concatenate(xs, axis=-1)
    else:
        hjk = functools.reduce(jnp.maximum, xs)
    pooled = []
    for g in range(num_graphs):
        m = (batch == g)[:, None]
        pooled.append(jnp.max(jnp.where(m, hjk, -jnp.inf), axis=0))
    pooled = jnp.stack(pooled)
    wlin, blin = params["lin"]
    wout, bout = params["out"]
    z = jnp.maximum(pooled @ wlin + blin, 0.0)
    return z @ wout + bout


# ----------------------------------------------------------------------------
# Deterministic parameter construction (synthetic, mirrors __init__ shapes)
# ----------------------------------------------------------------------------
def make_params(key, hparams):
    num_layers = hparams["num_conv_layers"]
    f_in = hparams["num_node_features"]
    c = hparams["conv_size"]
    lin_size = hparams["lin_size"]
    out_size = hparams["output_size"]
    agg = hparams["aggregation_method"]

    keys = jax.random.split(key, 2 * num_layers + 4)
    conv = []
    fan_in = f_in
    for l in range(num_layers):
        w = jax.random.normal(keys[2 * l], (fan_in, c), jnp.float32) * 0.1
        b = jax.random.normal(keys[2 * l + 1], (1, c), jnp.float32) * 0.1
        conv.append((w, b))
        fan_in = c

    c_jk = c * num_layers if agg == "cat" else c
    wlin = jax.random.normal(keys[-4], (c_jk, lin_size), jnp.float32) * 0.1
    blin = jax.random.normal(keys[-3], (1, lin_size), jnp.float32) * 0.1
    wout = jax.random.normal(keys[-2], (lin_size, out_size), jnp.float32) * 0.1
    bout = jax.random.normal(keys[-1], (1, out_size), jnp.float32) * 0.1
    return {"conv": conv, "lin": (wlin, blin), "out": (wout, bout)}


if __name__ == "__main__":
    hparams = {
        "aggregation_method": "max",   # 'max' or 'cat' supported
        "num_conv_layers": 2,
        "num_node_features": 8,
        "conv_size": 32,
        "lin_size": 16,
        "output_size": 4,
    }

    key = jax.random.PRNGKey(0)
    k_x, k_p = jax.random.split(key)

    # Two graphs of 8 nodes each, undirected ring edges within each graph.
    n_per_graph, num_graphs = 8, 2
    n = n_per_graph * num_graphs
    src_list, dst_list = [], []
    for g in range(num_graphs):
        off = g * n_per_graph
        for i in range(n_per_graph):
            j = (i + 1) % n_per_graph
            src_list += [off + i, off + j]
            dst_list += [off + j, off + i]
    edge_index = jnp.array([src_list, dst_list], dtype=jnp.int32)            # [2, E]
    batch = jnp.repeat(jnp.arange(num_graphs, dtype=jnp.int32), n_per_graph)  # [N]
    x = jax.random.normal(k_x, (n, hparams["num_node_features"]), jnp.float32)
    pos = None  # unused by the reference forward

    params = make_params(k_p, hparams)

    fwd = jax.jit(functools.partial(
        jk_forward, num_graphs=num_graphs,
        aggregation_method=hparams["aggregation_method"]))
    out = fwd(x, edge_index, batch, params)
    jax.block_until_ready(out)

    assert out.shape == (num_graphs, hparams["output_size"])
    assert bool(jnp.all(jnp.isfinite(out)))
    ref = jk_reference(x, edge_index, batch, params, num_graphs=num_graphs,
                       aggregation_method=hparams["aggregation_method"])
    # bf16 H / HW on the MXU -> small expected drift vs f32 reference.
    assert bool(jnp.allclose(out, ref, rtol=0.1, atol=0.1)), (out, ref)
    print("KERNEL_OK")
</pallas_src>

<mosaic_0001>
module attributes {stable_mosaic.version = 11 : i64} {
  func.func @_xw_kernel(%arg0: i32, %arg1: memref<16x128xbf16, #tpu.memory_space<vmem>>, %arg2: memref<128x128xbf16, #tpu.memory_space<vmem>>, %arg3: memref<16x1xf32, #tpu.memory_space<vmem>>, %arg4: memref<16x128xbf16, #tpu.memory_space<vmem>>) attributes {dimension_semantics = [#tpu.dimension_semantics<parallel>], iteration_bounds = array<i64: 1>, scalar_prefetch = 0 : i64, scratch_operands = 0 : i64, tpu.core_type = #tpu.core_type<tc>, window_params = [{transform_indices = @transform_0, window_bounds = array<i64: 16, 128>}, {pipeline_mode = #tpu.pipeline_mode<synchronous>, transform_indices = @transform_1, window_bounds = array<i64: 128, 128>}, {transform_indices = @transform_2, window_bounds = array<i64: 16, 1>}, {transform_indices = @transform_3, window_bounds = array<i64: 16, 128>}]} {
    %c0 = arith.constant 0 : index
    %c0_0 = arith.constant 0 : index
    %0 = vector.load %arg1[%c0, %c0_0] : memref<16x128xbf16, #tpu.memory_space<vmem>>, vector<16x128xbf16>
    %c0_1 = arith.constant 0 : index
    %c0_2 = arith.constant 0 : index
    %1 = vector.load %arg2[%c0_1, %c0_2] : memref<128x128xbf16, #tpu.memory_space<vmem>>, vector<128x128xbf16>
    %cst = arith.constant dense<0.000000e+00> : vector<16x128xf32>
    %2 = tpu.matmul %0, %1, %cst {dimension_numbers = #tpu.dot_dimension_numbers<[1], [0], [0], [1], [0, 0, 1, 1], [], []>} : vector<16x128xbf16>, vector<128x128xbf16>, vector<16x128xf32> -> vector<16x128xf32>
    %c0_3 = arith.constant 0 : index
    %c0_4 = arith.constant 0 : index
    %3 = vector.load %arg3[%c0_3, %c0_4] : memref<16x1xf32, #tpu.memory_space<vmem>>, vector<16x1xf32>
    %4 = vector.broadcast %3 : vector<16x1xf32> to vector<16x128xf32>
    %5 = arith.mulf %2, %4 : vector<16x128xf32>
    %6 = arith.truncf %5 : vector<16x128xf32> to vector<16x128xbf16>
    %c0_5 = arith.constant 0 : index
    %c0_6 = arith.constant 0 : index
    %7 = vector.load %arg4[%c0_5, %c0_6] : memref<16x128xbf16, #tpu.memory_space<vmem>>, vector<16x128xbf16>
    tpu.vector_store %arg4[%c0_5, %c0_6], %6 {strides = array<i32>} : memref<16x128xbf16, #tpu.memory_space<vmem>>, vector<16x128xbf16>,
    return
  }
  func.func @transform_0(%arg0: i32) -> (i32, i32) {
    %c0_i32 = arith.constant 0 : i32
    %c0_i32_0 = arith.constant 0 : i32
    return %arg0, %c0_i32 : i32, i32
  }
  func.func @transform_1(%arg0: i32) -> (i32, i32) {
    %c0_i32 = arith.constant 0 : i32
    %c0_i32_0 = arith.constant 0 : i32
    %c0_i32_1 = arith.constant 0 : i32
    return %c0_i32, %c0_i32_0 : i32, i32
  }
  func.func @transform_2(%arg0: i32) -> (i32, i32) {
    %c0_i32 = arith.constant 0 : i32
    %c0_i32_0 = arith.constant 0 : i32
    return %arg0, %c0_i32 : i32, i32
  }
  func.func @transform_3(%arg0: i32) -> (i32, i32) {
    %c0_i32 = arith.constant 0 : i32
    %c0_i32_0 = arith.constant 0 : i32
    return %arg0, %c0_i32 : i32, i32
  }
}

module attributes {stable_mosaic.version = 11 : i64} {
  func.func @_prop_kernel(%arg0: i32, %arg1: i32, %arg2: memref<16x16xbf16, #tpu.memory_space<vmem>>, %arg3: memref<16x128xbf16, #tpu.memory_space<vmem>>, %arg4: memref<1x128xf32, #tpu.memory_space<vmem>>, %arg5: memref<16x1xf32, #tpu.memory_space<vmem>>, %arg6: memref<16x128xf32, #tpu.memory_space<vmem>>, %arg7: memref<16x128xbf16, #tpu.memory_space<vmem>>, %arg8: memref<16x128xf32, #tpu.memory_space<vmem>>, %arg9: memref<16x128xf32, #tpu.memory_space<vmem>>) attributes {dimension_semantics = [#tpu.dimension_semantics<parallel>, #tpu.dimension_semantics<arbitrary>], iteration_bounds = array<i64: 1, 1>, scalar_prefetch = 0 : i64, scratch_operands = 1 : i64, tpu.core_type = #tpu.core_type<tc>, window_params = [{transform_indices = @transform_0, window_bounds = array<i64: 16, 16>}, {pipeline_mode = #tpu.pipeline_mode<synchronous>, transform_indices = @transform_1, window_bounds = array<i64: 16, 128>}, {pipeline_mode = #tpu.pipeline_mode<synchronous>, transform_indices = @transform_2, window_bounds = array<i64: 1, 128>}, {transform_indices = @transform_3, window_bounds = array<i64: 16, 1>}, {transform_indices = @transform_4, window_bounds = array<i64: 16, 128>}, {transform_indices = @transform_5, window_bounds = array<i64: 16, 128>}, {transform_indices = @transform_6, window_bounds = array<i64: 16, 128>}]} {
    %c0_i32 = arith.constant 0 : i32
    %0 = arith.cmpi eq, %arg1, %c0_i32 : i32
    %1 = arith.extui %0 : i1 to i32
    %c0_i32_0 = arith.constant 0 : i32
    %2 = arith.cmpi ne, %1, %c0_i32_0 : i32
    scf.if %2 {
      %cst_9 = arith.constant 0.000000e+00 : f32
      %15 = vector.broadcast %cst_9 : f32 to vector<16x128xf32>
      %c0_10 = arith.constant 0 : index
      %c0_11 = arith.constant 0 : index
      %16 = vector.load %arg9[%c0_10, %c0_11] : memref<16x128xf32, #tpu.memory_space<vmem>>, vector<16x128xf32>
      tpu.vector_store %arg9[%c0_10, %c0_11], %15 {strides = array<i32>} : memref<16x128xf32, #tpu.memory_space<vmem>>, vector<16x128xf32>,
    } else {
    }
    %c16_i32 = arith.constant 16 : i32
    %3 = arith.muli %arg1, %c16_i32 : i32
    %4 = tpu.assume_multiple %3, 16 : i32
    %c0 = arith.constant 0 : index
    %c0_1 = arith.constant 0 : index
    %5 = vector.load %arg9[%c0, %c0_1] : memref<16x128xf32, #tpu.memory_space<vmem>>, vector<16x128xf32>
    %c0_2 = arith.constant 0 : index
    %c0_3 = arith.constant 0 : index
    %6 = vector.load %arg2[%c0_2, %c0_3] : memref<16x16xbf16, #tpu.memory_space<vmem>>, vector<16x16xbf16>
    %7 = arith.index_cast %4 : i32 to index
    %c0_4 = arith.constant 0 : index
    %8 = vector.load %arg3[%7, %c0_4] : memref<16x128xbf16, #tpu.memory_space<vmem>>, vector<16x128xbf16>
    %cst = arith.constant dense<0.000000e+00> : vector<16x128xf32>
    %9 = tpu.matmul %6, %8, %cst {dimension_numbers = #tpu.dot_dimension_numbers<[1], [0], [0], [1], [0, 0, 1, 1], [], []>} : vector<16x16xbf16>, vector<16x128xbf16>, vector<16x128xf32> -> vector<16x128xf32>
    %10 = arith.addf %5, %9 : vector<16x128xf32>
    %c0_5 = arith.constant 0 : index
    %c0_6 = arith.constant 0 : index
    %11 = vector.load %arg9[%c0_5, %c0_6] : memref<16x128xf32, #tpu.memory_space<vmem>>, vector<16x128xf32>
    tpu.vector_store %arg9[%c0_5, %c0_6], %10 {strides = array<i32>} : memref<16x128xf32, #tpu.memory_space<vmem>>, vector<16x128xf32>,
    %c0_i32_7 = arith.constant 0 : i32
    %12 = arith.cmpi eq, %arg1, %c0_i32_7 : i32
    %13 = arith.extui %12 : i1 to i32
    %c0_i32_8 = arith.constant 0 : i32
    %14 = arith.cmpi ne, %13, %c0_i32_8 : i32
    scf.if %14 {
      %c0_9 = arith.constant 0 : index
      %c0_10 = arith.constant 0 : index
      %15 = vector.load %arg9[%c0_9, %c0_10] : memref<16x128xf32, #tpu.memory_space<vmem>>, vector<16x128xf32>
      %c0_11 = arith.constant 0 : index
      %c0_12 = arith.constant 0 : index
      %16 = vector.load %arg5[%c0_11, %c0_12] : memref<16x1xf32, #tpu.memory_space<vmem>>, vector<16x1xf32>
      %17 = vector.broadcast %16 : vector<16x1xf32> to vector<16x128xf32>
      %18 = arith.mulf %15, %17 : vector<16x128xf32>
      %c0_13 = arith.constant 0 : index
      %c0_14 = arith.constant 0 : index
      %19 = vector.load %arg4[%c0_13, %c0_14] : memref<1x128xf32, #tpu.memory_space<vmem>>, vector<1x128xf32>
      %20 = vector.broadcast %19 : vector<1x128xf32> to vector<16x128xf32>
      %21 = arith.addf %18, %20 : vector<16x128xf32>
      %cst_15 = arith.constant 0.000000e+00 : f32
      %22 = vector.broadcast %cst_15 : f32 to vector<16x128xf32>
      %23 = arith.maximumf %21, %22 : vector<16x128xf32>
      %24 = arith.truncf %23 : vector<16x128xf32> to vector<16x128xbf16>
      %c0_16 = arith.constant 0 : index
      %c0_17 = arith.constant 0 : index
      %25 = vector.load %arg7[%c0_16, %c0_17] : memref<16x128xbf16, #tpu.memory_space<vmem>>, vector<16x128xbf16>
      tpu.vector_store %arg7[%c0_16, %c0_17], %24 {strides = array<i32>} : memref<16x128xbf16, #tpu.memory_space<vmem>>, vector<16x128xbf16>,
      %c0_18 = arith.constant 0 : index
      %c0_19 = arith.constant 0 : index
      %26 = vector.load %arg6[%c0_18, %c0_19] : memref<16x128xf32, #tpu.memory_space<vmem>>, vector<16x128xf32>
      %27 = arith.maximumf %26, %23 : vector<16x128xf32>
      %c0_20 = arith.constant 0 : index
      %c0_21 = arith.constant 0 : index
      %28 = vector.load %arg8[%c0_20, %c0_21] : memref<16x128xf32, #tpu.memory_space<vmem>>, vector<16x128xf32>
      tpu.vector_store %arg8[%c0_20, %c0_21], %27 {strides = array<i32>} : memref<16x128xf32, #tpu.memory_space<vmem>>, vector<16x128xf32>,
    } else {
    }
    return
  }
  func.func @transform_0(%arg0: i32, %arg1: i32) -> (i32, i32) {
    %c0_i32 = arith.constant 0 : i32
    return %arg0, %arg1 : i32, i32
  }
  func.func @transform_1(%arg0: i32, %arg1: i32) -> (i32, i32) {
    %c0_i32 = arith.constant 0 : i32
    %c0_i32_0 = arith.constant 0 : i32
    %c0_i32_1 = arith.constant 0 : i32
    return %c0_i32, %c0_i32_0 : i32, i32
  }
  func.func @transform_2(%arg0: i32, %arg1: i32) -> (i32, i32) {
    %c0_i32 = arith.constant 0 : i32
    %c0_i32_0 = arith.constant 0 : i32
    %c0_i32_1 = arith.constant 0 : i32
    return %c0_i32, %c0_i32_0 : i32, i32
  }
  func.func @transform_3(%arg0: i32, %arg1: i32) -> (i32, i32) {
    %c0_i32 = arith.constant 0 : i32
    %c0_i32_0 = arith.constant 0 : i32
    return %arg0, %c0_i32 : i32, i32
  }
  func.func @transform_4(%arg0: i32, %arg1: i32) -> (i32, i32) {
    %c0_i32 = arith.constant 0 : i32
    %c0_i32_0 = arith.constant 0 : i32
    return %arg0, %c0_i32 : i32, i32
  }
  func.func @transform_5(%arg0: i32, %arg1: i32) -> (i32, i32) {
    %c0_i32 = arith.constant 0 : i32
    %c0_i32_0 = arith.constant 0 : i32
    return %arg0, %c0_i32 : i32, i32
  }
  func.func @transform_6(%arg0: i32, %arg1: i32) -> (i32, i32) {
    %c0_i32 = arith.constant 0 : i32
    %c0_i32_0 = arith.constant 0 : i32
    return %arg0, %c0_i32 : i32, i32
  }
}

module attributes {stable_mosaic.version = 11 : i64} {
  func.func @_prop_kernel(%arg0: i32, %arg1: i32, %arg2: memref<16x16xbf16, #tpu.memory_space<vmem>>, %arg3: memref<16x128xbf16, #tpu.memory_space<vmem>>, %arg4: memref<1x128xf32, #tpu.memory_space<vmem>>, %arg5: memref<16x1xf32, #tpu.memory_space<vmem>>, %arg6: memref<16x128xf32, #tpu.memory_space<vmem>>, %arg7: memref<16x128xbf16, #tpu.memory_space<vmem>>, %arg8: memref<16x128xf32, #tpu.memory_space<vmem>>, %arg9: memref<16x128xf32, #tpu.memory_space<vmem>>) attributes {dimension_semantics = [#tpu.dimension_semantics<parallel>, #tpu.dimension_semantics<arbitrary>], iteration_bounds = array<i64: 1, 1>, scalar_prefetch = 0 : i64, scratch_operands = 1 : i64, tpu.core_type = #tpu.core_type<tc>, window_params = [{transform_indices = @transform_0, window_bounds = array<i64: 16, 16>}, {pipeline_mode = #tpu.pipeline_mode<synchronous>, transform_indices = @transform_1, window_bounds = array<i64: 16, 128>}, {pipeline_mode = #tpu.pipeline_mode<synchronous>, transform_indices = @transform_2, window_bounds = array<i64: 1, 128>}, {transform_indices = @transform_3, window_bounds = array<i64: 16, 1>}, {transform_indices = @transform_4, window_bounds = array<i64: 16, 128>}, {transform_indices = @transform_5, window_bounds = array<i64: 16, 128>}, {transform_indices = @transform_6, window_bounds = array<i64: 16, 128>}]} {
    %c0_i32 = arith.constant 0 : i32
    %0 = arith.cmpi eq, %arg1, %c0_i32 : i32
    %1 = arith.extui %0 : i1 to i32
    %c0_i32_0 = arith.constant 0 : i32
    %2 = arith.cmpi ne, %1, %c0_i32_0 : i32
    scf.if %2 {
      %cst_9 = arith.constant 0.000000e+00 : f32
      %15 = vector.broadcast %cst_9 : f32 to vector<16x128xf32>
      %c0_10 = arith.constant 0 : index
      %c0_11 = arith.constant 0 : index
      %16 = vector.load %arg9[%c0_10, %c0_11] : memref<16x128xf32, #tpu.memory_space<vmem>>, vector<16x128xf32>
      tpu.vector_store %arg9[%c0_10, %c0_11], %15 {strides = array<i32>} : memref<16x128xf32, #tpu.memory_space<vmem>>, vector<16x128xf32>,
    } else {
    }
    %c16_i32 = arith.constant 16 : i32
    %3 = arith.muli %arg1, %c16_i32 : i32
    %4 = tpu.assume_multiple %3, 16 : i32
    %c0 = arith.constant 0 : index
    %c0_1 = arith.constant 0 : index
    %5 = vector.load %arg9[%c0, %c0_1] : memref<16x128xf32, #tpu.memory_space<vmem>>, vector<16x128xf32>
    %c0_2 = arith.constant 0 : index
    %c0_3 = arith.constant 0 : index
    %6 = vector.load %arg2[%c0_2, %c0_3] : memref<16x16xbf16, #tpu.memory_space<vmem>>, vector<16x16xbf16>
    %7 = arith.index_cast %4 : i32 to index
    %c0_4 = arith.constant 0 : index
    %8 = vector.load %arg3[%7, %c0_4] : memref<16x128xbf16, #tpu.memory_space<vmem>>, vector<16x128xbf16>
    %cst = arith.constant dense<0.000000e+00> : vector<16x128xf32>
    %9 = tpu.matmul %6, %8, %cst {dimension_numbers = #tpu.dot_dimension_numbers<[1], [0], [0], [1], [0, 0, 1, 1], [], []>} : vector<16x16xbf16>, vector<16x128xbf16>, vector<16x128xf32> -> vector<16x128xf32>
    %10 = arith.addf %5, %9 : vector<16x128xf32>
    %c0_5 = arith.constant 0 : index
    %c0_6 = arith.constant 0 : index
    %11 = vector.load %arg9[%c0_5, %c0_6] : memref<16x128xf32, #tpu.memory_space<vmem>>, vector<16x128xf32>
    tpu.vector_store %arg9[%c0_5, %c0_6], %10 {strides = array<i32>} : memref<16x128xf32, #tpu.memory_space<vmem>>, vector<16x128xf32>,
    %c0_i32_7 = arith.constant 0 : i32
    %12 = arith.cmpi eq, %arg1, %c0_i32_7 : i32
    %13 = arith.extui %12 : i1 to i32
    %c0_i32_8 = arith.constant 0 : i32
    %14 = arith.cmpi ne, %13, %c0_i32_8 : i32
    scf.if %14 {
      %c0_9 = arith.constant 0 : index
      %c0_10 = arith.constant 0 : index
      %15 = vector.load %arg9[%c0_9, %c0_10] : memref<16x128xf32, #tpu.memory_space<vmem>>, vector<16x128xf32>
      %c0_11 = arith.constant 0 : index
      %c0_12 = arith.constant 0 : index
      %16 = vector.load %arg5[%c0_11, %c0_12] : memref<16x1xf32, #tpu.memory_space<vmem>>, vector<16x1xf32>
      %17 = vector.broadcast %16 : vector<16x1xf32> to vector<16x128xf32>
      %18 = arith.mulf %15, %17 : vector<16x128xf32>
      %c0_13 = arith.constant 0 : index
      %c0_14 = arith.constant 0 : index
      %19 = vector.load %arg4[%c0_13, %c0_14] : memref<1x128xf32, #tpu.memory_space<vmem>>, vector<1x128xf32>
      %20 = vector.broadcast %19 : vector<1x128xf32> to vector<16x128xf32>
      %21 = arith.addf %18, %20 : vector<16x128xf32>
      %cst_15 = arith.constant 0.000000e+00 : f32
      %22 = vector.broadcast %cst_15 : f32 to vector<16x128xf32>
      %23 = arith.maximumf %21, %22 : vector<16x128xf32>
      %24 = arith.truncf %23 : vector<16x128xf32> to vector<16x128xbf16>
      %c0_16 = arith.constant 0 : index
      %c0_17 = arith.constant 0 : index
      %25 = vector.load %arg7[%c0_16, %c0_17] : memref<16x128xbf16, #tpu.memory_space<vmem>>, vector<16x128xbf16>
      tpu.vector_store %arg7[%c0_16, %c0_17], %24 {strides = array<i32>} : memref<16x128xbf16, #tpu.memory_space<vmem>>, vector<16x128xbf16>,
      %c0_18 = arith.constant 0 : index
      %c0_19 = arith.constant 0 : index
      %26 = vector.load %arg6[%c0_18, %c0_19] : memref<16x128xf32, #tpu.memory_space<vmem>>, vector<16x128xf32>
      %27 = arith.maximumf %26, %23 : vector<16x128xf32>
      %c0_20 = arith.constant 0 : index
      %c0_21 = arith.constant 0 : index
      %28 = vector.load %arg8[%c0_20, %c0_21] : memref<16x128xf32, #tpu.memory_space<vmem>>, vector<16x128xf32>
      tpu.vector_store %arg8[%c0_20, %c0_21], %27 {strides = array<i32>} : memref<16x128xf32, #tpu.memory_space<vmem>>, vector<16x128xf32>,
    } else {
    }
    return
  }
  func.func @transform_0(%arg0: i32, %arg1: i32) -> (i32, i32) {
    %c0_i32 = arith.constant 0 : i32
    return %arg0, %arg1 : i32, i32
  }
  func.func @transform_1(%arg0: i32, %arg1: i32) -> (i32, i32) {
    %c0_i32 = arith.constant 0 : i32
    %c0_i32_0 = arith.constant 0 : i32
    %c0_i32_1 = arith.constant 0 : i32
    return %c0_i32, %c0_i32_0 : i32, i32
  }
  func.func @transform_2(%arg0: i32, %arg1: i32) -> (i32, i32) {
    %c0_i32 = arith.constant 0 : i32
    %c0_i32_0 = arith.constant 0 : i32
    %c0_i32_1 = arith.constant 0 : i32
    return %c0_i32, %c0_i32_0 : i32, i32
  }
  func.func @transform_3(%arg0: i32, %arg1: i32) -> (i32, i32) {
    %c0_i32 = arith.constant 0 : i32
    %c0_i32_0 = arith.constant 0 : i32
    return %arg0, %c0_i32 : i32, i32
  }
  func.func @transform_4(%arg0: i32, %arg1: i32) -> (i32, i32) {
    %c0_i32 = arith.constant 0 : i32
    %c0_i32_0 = arith.constant 0 : i32
    return %arg0, %c0_i32 : i32, i32
  }
  func.func @transform_5(%arg0: i32, %arg1: i32) -> (i32, i32) {
    %c0_i32 = arith.constant 0 : i32
    %c0_i32_0 = arith.constant 0 : i32
    return %arg0, %c0_i32 : i32, i32
  }
  func.func @transform_6(%arg0: i32, %arg1: i32) -> (i32, i32) {
    %c0_i32 = arith.constant 0 : i32
    %c0_i32_0 = arith.constant 0 : i32
    return %arg0, %c0_i32 : i32, i32
  }
}

module attributes {stable_mosaic.version = 11 : i64} {
  func.func @_pool_head_kernel(%arg0: i32, %arg1: memref<16x128xf32, #tpu.memory_space<vmem>>, %arg2: memref<16x1xi32, #tpu.memory_space<vmem>>, %arg3: memref<128x128xf32, #tpu.memory_space<vmem>>, %arg4: memref<1x128xf32, #tpu.memory_space<vmem>>, %arg5: memref<128x128xf32, #tpu.memory_space<vmem>>, %arg6: memref<1x128xf32, #tpu.memory_space<vmem>>, %arg7: memref<8x128xf32, #tpu.memory_space<vmem>>, %arg8: memref<8x128xf32, #tpu.memory_space<vmem>>) attributes {dimension_semantics = [#tpu.dimension_semantics<arbitrary>], iteration_bounds = array<i64: 1>, scalar_prefetch = 0 : i64, scratch_operands = 1 : i64, tpu.core_type = #tpu.core_type<tc>, window_params = [{transform_indices = @transform_0, window_bounds = array<i64: 16, 128>}, {transform_indices = @transform_1, window_bounds = array<i64: 16, 1>}, {pipeline_mode = #tpu.pipeline_mode<synchronous>, transform_indices = @transform_2, window_bounds = array<i64: 128, 128>}, {pipeline_mode = #tpu.pipeline_mode<synchronous>, transform_indices = @transform_3, window_bounds = array<i64: 1, 128>}, {pipeline_mode = #tpu.pipeline_mode<synchronous>, transform_indices = @transform_4, window_bounds = array<i64: 128, 128>}, {pipeline_mode = #tpu.pipeline_mode<synchronous>, transform_indices = @transform_5, window_bounds = array<i64: 1, 128>}, {pipeline_mode = #tpu.pipeline_mode<synchronous>, transform_indices = @transform_6, window_bounds = array<i64: 8, 128>}]} {
    %c0_i32 = arith.constant 0 : i32
    %0 = arith.cmpi eq, %arg0, %c0_i32 : i32
    %1 = arith.extui %0 : i1 to i32
    %c0_i32_0 = arith.constant 0 : i32
    %2 = arith.cmpi ne, %1, %c0_i32_0 : i32
    scf.if %2 {
      %cst_11 = arith.constant -1.000000e+30 : f32
      %23 = vector.broadcast %cst_11 : f32 to vector<8x128xf32>
      %c0_12 = arith.constant 0 : index
      %c0_13 = arith.constant 0 : index
      %24 = vector.load %arg8[%c0_12, %c0_13] : memref<8x128xf32, #tpu.memory_space<vmem>>, vector<8x128xf32>
      tpu.vector_store %arg8[%c0_12, %c0_13], %23 {strides = array<i32>} : memref<8x128xf32, #tpu.memory_space<vmem>>, vector<8x128xf32>,
    } else {
    }
    %c0 = arith.constant 0 : index
    %c0_1 = arith.constant 0 : index
    %3 = vector.load %arg1[%c0, %c0_1] : memref<16x128xf32, #tpu.memory_space<vmem>>, vector<16x128xf32>
    %c0_2 = arith.constant 0 : index
    %c0_3 = arith.constant 0 : index
    %4 = vector.load %arg2[%c0_2, %c0_3] : memref<16x1xi32, #tpu.memory_space<vmem>>, vector<16x1xi32>
    %5 = tpu.iota {dimensions = array<i32: 0>} : vector<8x16x1xi32>
    %6 = vector.shape_cast %4 : vector<16x1xi32> to vector<1x16x1xi32>
    %7 = vector.broadcast %6 : vector<1x16x1xi32> to vector<8x16x1xi32>
    %8 = arith.cmpi eq, %7, %5 : vector<8x16x1xi32>
    %9 = vector.shape_cast %3 : vector<16x128xf32> to vector<1x16x128xf32>
    %cst = arith.constant -1.000000e+30 : f32
    %10 = vector.shape_cast %8 : vector<8x16x1xi1> to vector<8x16x1xi1>
    %11 = vector.broadcast %10 : vector<8x16x1xi1> to vector<8x16x128xi1>
    %12 = vector.shape_cast %9 : vector<1x16x128xf32> to vector<1x16x128xf32>
    %13 = vector.broadcast %12 : vector<1x16x128xf32> to vector<8x16x128xf32>
    %14 = vector.broadcast %cst : f32 to vector<8x16x128xf32>
    %15 = arith.select %11, %13, %14 : vector<8x16x128xi1>, vector<8x16x128xf32>
    %c0_4 = arith.constant 0 : index
    %c0_5 = arith.constant 0 : index
    %16 = vector.load %arg8[%c0_4, %c0_5] : memref<8x128xf32, #tpu.memory_space<vmem>>, vector<8x128xf32>
    %cst_6 = arith.constant dense<0xFF800000> : vector<8x128xf32>
    %17 = vector.multi_reduction <maximumf>, %15, %cst_6 [1] : vector<8x16x128xf32> to vector<8x128xf32>
    %18 = arith.maximumf %16, %17 : vector<8x128xf32>
    %c0_7 = arith.constant 0 : index
    %c0_8 = arith.constant 0 : index
    %19 = vector.load %arg8[%c0_7, %c0_8] : memref<8x128xf32, #tpu.memory_space<vmem>>, vector<8x128xf32>
    tpu.vector_store %arg8[%c0_7, %c0_8], %18 {strides = array<i32>} : memref<8x128xf32, #tpu.memory_space<vmem>>, vector<8x128xf32>,
    %c0_i32_9 = arith.constant 0 : i32
    %20 = arith.cmpi eq, %arg0, %c0_i32_9 : i32
    %21 = arith.extui %20 : i1 to i32
    %c0_i32_10 = arith.constant 0 : i32
    %22 = arith.cmpi ne, %21, %c0_i32_10 : i32
    scf.if %22 {
      %c0_11 = arith.constant 0 : index
      %c0_12 = arith.constant 0 : index
      %23 = vector.load %arg8[%c0_11, %c0_12] : memref<8x128xf32, #tpu.memory_space<vmem>>, vector<8x128xf32>
      %cst_13 = arith.constant -1.000000e+29 : f32
      %24 = vector.broadcast %cst_13 : f32 to vector<8x128xf32>
      %25 = arith.cmpf ogt, %23, %24 : vector<8x128xf32>
      %cst_14 = arith.constant 0.000000e+00 : f32
      %26 = vector.broadcast %cst_14 : f32 to vector<8x128xf32>
      %27 = arith.select %25, %23, %26 : vector<8x128xi1>, vector<8x128xf32>
      %c0_15 = arith.constant 0 : index
      %c0_16 = arith.constant 0 : index
      %28 = vector.load %arg3[%c0_15, %c0_16] : memref<128x128xf32, #tpu.memory_space<vmem>>, vector<128x128xf32>
      %cst_17 = arith.constant dense<0.000000e+00> : vector<8x128xf32>
      %29 = tpu.matmul %27, %28, %cst_17 {dimension_numbers = #tpu.dot_dimension_numbers<[1], [0], [0], [1], [0, 0, 1, 1], [], []>} : vector<8x128xf32>, vector<128x128xf32>, vector<8x128xf32> -> vector<8x128xf32>
      %c0_18 = arith.constant 0 : index
      %c0_19 = arith.constant 0 : index
      %30 = vector.load %arg4[%c0_18, %c0_19] : memref<1x128xf32, #tpu.memory_space<vmem>>, vector<1x128xf32>
      %31 = vector.broadcast %30 : vector<1x128xf32> to vector<8x128xf32>
      %32 = arith.addf %29, %31 : vector<8x128xf32>
      %cst_20 = arith.constant 0.000000e+00 : f32
      %33 = vector.broadcast %cst_20 : f32 to vector<8x128xf32>
      %34 = arith.maximumf %32, %33 : vector<8x128xf32>
      %c0_21 = arith.constant 0 : index
      %c0_22 = arith.constant 0 : index
      %35 = vector.load %arg5[%c0_21, %c0_22] : memref<128x128xf32, #tpu.memory_space<vmem>>, vector<128x128xf32>
      %cst_23 = arith.constant dense<0.000000e+00> : vector<8x128xf32>
      %36 = tpu.matmul %34, %35, %cst_23 {dimension_numbers = #tpu.dot_dimension_numbers<[1], [0], [0], [1], [0, 0, 1, 1], [], []>} : vector<8x128xf32>, vector<128x128xf32>, vector<8x128xf32> -> vector<8x128xf32>
      %c0_24 = arith.constant 0 : index
      %c0_25 = arith.constant 0 : index
      %37 = vector.load %arg6[%c0_24, %c0_25] : memref<1x128xf32, #tpu.memory_space<vmem>>, vector<1x128xf32>
      %38 = vector.broadcast %37 : vector<1x128xf32> to vector<8x128xf32>
      %39 = arith.addf %36, %38 : vector<8x128xf32>
      %c0_26 = arith.constant 0 : index
      %c0_27 = arith.constant 0 : index
      %40 = vector.load %arg7[%c0_26, %c0_27] : memref<8x128xf32, #tpu.memory_space<vmem>>, vector<8x128xf32>
      tpu.vector_store %arg7[%c0_26, %c0_27], %39 {strides = array<i32>} : memref<8x128xf32, #tpu.memory_space<vmem>>, vector<8x128xf32>,
    } else {
    }
    return
  }
  func.func @transform_0(%arg0: i32) -> (i32, i32) {
    %c0_i32 = arith.constant 0 : i32
    %c0_i32_0 = arith.constant 0 : i32
    return %arg0, %c0_i32 : i32, i32
  }
  func.func @transform_1(%arg0: i32) -> (i32, i32) {
    %c0_i32 = arith.constant 0 : i32
    %c0_i32_0 = arith.constant 0 : i32
    return %arg0, %c0_i32 : i32, i32
  }
  func.func @transform_2(%arg0: i32) -> (i32, i32) {
    %c0_i32 = arith.constant 0 : i32
    %c0_i32_0 = arith.constant 0 : i32
    %c0_i32_1 = arith.constant 0 : i32
    return %c0_i32, %c0_i32_0 : i32, i32
  }
  func.func @transform_3(%arg0: i32) -> (i32, i32) {
    %c0_i32 = arith.constant 0 : i32
    %c0_i32_0 = arith.constant 0 : i32
    %c0_i32_1 = arith.constant 0 : i32
    return %c0_i32, %c0_i32_0 : i32, i32
  }
  func.func @transform_4(%arg0: i32) -> (i32, i32) {
    %c0_i32 = arith.constant 0 : i32
    %c0_i32_0 = arith.constant 0 : i32
    %c0_i32_1 = arith.constant 0 : i32
    return %c0_i32, %c0_i32_0 : i32, i32
  }
  func.func @transform_5(%arg0: i32) -> (i32, i32) {
    %c0_i32 = arith.constant 0 : i32
    %c0_i32_0 = arith.constant 0 : i32
    %c0_i32_1 = arith.constant 0 : i32
    return %c0_i32, %c0_i32_0 : i32, i32
  }
  func.func @transform_6(%arg0: i32) -> (i32, i32) {
    %c0_i32 = arith.constant 0 : i32
    %c0_i32_0 = arith.constant 0 : i32
    %c0_i32_1 = arith.constant 0 : i32
    return %c0_i32, %c0_i32_0 : i32, i32
  }
}

</mosaic_0001>

<llo_original>
// kernel: jk_forward.5
$region0: #{jk_forward.5}
  #allocation0 [shape = 'u32[]', space=smem, size = 0x4, offset = 0x4, fixed_abs, tag = 'smem constant byte address 0x4 - core index']
  #allocation1 [shape = 'u32[72,128]{1,0:T(1,128)}', space=vmem, size = 0x9000, scoped, tag = 'internal scratch']
  %s0 = inlined_call_operand.vmem [shape: bf16[16,128], index: 0, kind: input, shape index: {}]
  %s1 = inlined_call_operand.vmem [shape: bf16[128,128], index: 1, kind: input, shape index: {}]
  %s2 = inlined_call_operand.vmem [shape: f32[16,1], index: 2, kind: input, shape index: {}]
  %s3 = inlined_call_operand.vmem [shape: bf16[16,128], index: 3, kind: output, shape index: {}]
  %s4 = sld [smem:[#allocation0]]
  $region22: #{jk_forward.5} parent=0
    _
  %s6 = ssub.s32 1, %s4
  %s7 = scalar_select 0, %s6, %s4
  // Predicated region
  $region2: #{jk_forward.5} parent=0 // pred_check
    _
  $region3: #{jk_forward.5} parent=0 // pred_check_branch
    %9 = sbr.rel (0) target = $region5
  $region4: #{jk_forward.5} parent=0 // pred_region
    _
  $region5: #{jk_forward.5} parent=0 // pred_fallthru
    _
  // Predicated region
  $region6: #{jk_forward.5} parent=0 // pred_check
    _
  $region7: #{jk_forward.5} parent=0 // pred_check_branch
    %11 = sbr.rel (0) target = $region9
  $region8: #{jk_forward.5} parent=0 // pred_region
    _
  $region9: #{jk_forward.5} parent=0 // pred_fallthru
    _
  // Predicated region
  $region10: #{jk_forward.5} parent=0 // pred_check
    _
  $region11: #{jk_forward.5} parent=0 // pred_check_branch
    %13 = sbr.rel (0) target = $region13
  $region12: #{jk_forward.5} parent=0 // pred_region
    _
  $region13: #{jk_forward.5} parent=0 // pred_fallthru
    _
  %v14 = vld [vmem:[%s0] sm:$0xf]
  %v15 = vld [vmem:[%s0 + $0x4] sm:$0xf]
  %v16 = vld [vmem:[%s1] sm:$0xf]
  %v17 = vld [vmem:[%s1 + $0x4] sm:$0xf]
  %v18 = vld [vmem:[%s1 + $0x8] sm:$0xf]
  %v19 = vld [vmem:[%s1 + $0xc] sm:$0xf]
  %v20 = vld [vmem:[%s1 + $0x10] sm:$0xf]
  %v21 = vld [vmem:[%s1 + $0x14] sm:$0xf]
  %v22 = vld [vmem:[%s1 + $0x18] sm:$0xf]
  %v23 = vld [vmem:[%s1 + $0x1c] sm:$0xf]
  %v24 = vld [vmem:[%s1 + $0x20] sm:$0xf]
  %v25 = vld [vmem:[%s1 + $0x24] sm:$0xf]
  %v26 = vld [vmem:[%s1 + $0x28] sm:$0xf]
  %v27 = vld [vmem:[%s1 + $0x2c] sm:$0xf]
  %v28 = vld [vmem:[%s1 + $0x30] sm:$0xf]
  %v29 = vld [vmem:[%s1 + $0x34] sm:$0xf]
  %v30 = vld [vmem:[%s1 + $0x38] sm:$0xf]
  %v31 = vld [vmem:[%s1 + $0x3c] sm:$0xf]
  %v34 = vunpack.c.l.b16 %v14
  %v35 = vunpack.c.l.b16 %v15
  %v36 = vpack.c.b16 %v35, %v34
  %v54 = vunpack.c.l.b16 %v16
  %v55 = vunpack.c.l.b16 %v17
  %v56 = vunpack.c.l.b16 %v18
  %v57 = vunpack.c.l.b16 %v19
  %v58 = vunpack.c.l.b16 %v20
  %v59 = vunpack.c.l.b16 %v21
  %v60 = vunpack.c.l.b16 %v22
  %v61 = vunpack.c.l.b16 %v23
  %v62 = vunpack.c.l.b16 %v24
  %v63 = vunpack.c.l.b16 %v25
  %v64 = vunpack.c.l.b16 %v26
  %v65 = vunpack.c.l.b16 %v27
  %v66 = vunpack.c.l.b16 %v28
  %v67 = vunpack.c.l.b16 %v29
  %v68 = vunpack.c.l.b16 %v30
  %v69 = vunpack.c.l.b16 %v31
  %v70 = vpack.c.b16 %v55, %v54
  %v71 = vpack.c.b16 %v57, %v56
  %v72 = vpack.c.b16 %v59, %v58
  %v73 = vpack.c.b16 %v61, %v60
  %v74 = vpack.c.b16 %v63, %v62
  %v75 = vpack.c.b16 %v65, %v64
  %v76 = vpack.c.b16 %v67, %v66
  %v77 = vpack.c.b16 %v69, %v68
  %86 = vmatpush.bf16.msra.mxu0 %v77
  %87 = vmatpush.bf16.msra.mxu0 %v76
  %88 = vmatpush.bf16.msra.mxu0 %v75
  %89 = vmatpush.bf16.msra.mxu0 %v74
  %90 = vmatpush.bf16.msra.mxu0 %v73
  %91 = vmatpush.bf16.msra.mxu0 %v72
  %92 = vmatpush.bf16.msra.mxu0 %v71
  %93 = vmatpush.bf16.msra.mxu0 %v70
  %94 = vmatmul.bf16.gmra.mxu0 %v36
  %v95 = vpop.f32.mrf.mxu0
  %v96 = vadd.f32 0.0, %v95
  %v97 = vpop.f32.mrf.mxu0
  %v98 = vadd.f32 0.0, %v97
  %99 = vdwg.mxu0
  %v100 = vld [vmem:[%s2] sm:$0xff]
  %v101 = vld [vmem:[%s2 + $0x8] sm:$0xff]
  %103 = vset.pattern.permute.xlu0 0
  %104 = vperm.xlu0 %103, %v100
  %v105 = vpop.permute.xlu0 %104
  %108 = vset.pattern.permute.xlu0 0
  %109 = vperm.xlu0 %108, %v101
  %v110 = vpop.permute.xlu0 %109
  %v112 = vmul.f32 %v96, %v105
  %v113 = vmul.f32 %v98, %v110
  %v114 = vpack.c.bf16 %v112, %v112
  %v115 = vpack.c.bf16 %v113, %v113
  %116 = vst [vmem:[%s3] sm:$0xf] %v114
  %117 = vst [vmem:[%s3 + $0x4] sm:$0xf] %v115
  // Predicated region
  $region14: #{jk_forward.5} parent=0 // pred_check
    _
  $region15: #{jk_forward.5} parent=0 // pred_check_branch
    %119 = sbr.rel (0) target = $region17
  $region16: #{jk_forward.5} parent=0 // pred_region
    _
  $region17: #{jk_forward.5} parent=0 // pred_fallthru
    _
  // Predicated region
  $region18: #{jk_forward.5} parent=0 // pred_check
    _
  $region19: #{jk_forward.5} parent=0 // pred_check_branch
    %121 = sbr.rel (0) target = $region21
  $region20: #{jk_forward.5} parent=0 // pred_region
    _
  $region21: #{jk_forward.5} parent=0 // pred_fallthru
    _

// kernel: jk_forward.6
$region0: #{jk_forward.6}
  #allocation0 [shape = 'u32[]', space=smem, size = 0x4, offset = 0x4, fixed_abs, tag = 'smem constant byte address 0x4 - core index']
  #allocation1 [shape = 'u32[72,128]{1,0:T(1,128)}', space=vmem, size = 0x9000, scoped, tag = 'internal scratch']
  #allocation2 [shape = 'f32[16,128]{1,0:T(8,128)}', space=vmem, size = 0x2000, scoped, tag = 'scratch operand']
  %s0 = inlined_call_operand.vmem [shape: bf16[16,16], index: 0, kind: input, shape index: {}]
  %s1 = inlined_call_operand.vmem [shape: bf16[16,128], index: 1, kind: input, shape index: {}]
  %s2 = inlined_call_operand.vmem [shape: f32[1,128], index: 2, kind: input, shape index: {}]
  %s3 = inlined_call_operand.vmem [shape: f32[16,1], index: 3, kind: input, shape index: {}]
  %s4 = inlined_call_operand.vmem [shape: f32[16,128], index: 4, kind: input, shape index: {}]
  %s5 = inlined_call_operand.vmem [shape: bf16[16,128], index: 5, kind: output, shape index: {0}]
  %s6 = inlined_call_operand.vmem [shape: f32[16,128], index: 6, kind: output, shape index: {1}]
  %7 = xla_tuple %s5, %s6
  %s8 = sld [smem:[#allocation0]]
  $region46: #{jk_forward.6} parent=0
    _
  %s10 = ssub.s32 1, %s8
  %s11 = scalar_select 0, %s10, %s8
  // Predicated region
  $region2: #{jk_forward.6} parent=0 // pred_check
    _
  $region3: #{jk_forward.6} parent=0 // pred_check_branch
    %13 = sbr.rel (0) target = $region5
  $region4: #{jk_forward.6} parent=0 // pred_region
    _
  $region5: #{jk_forward.6} parent=0 // pred_fallthru
    _
  // Predicated region
  $region6: #{jk_forward.6} parent=0 // pred_check
    _
  $region7: #{jk_forward.6} parent=0 // pred_check_branch
    %15 = sbr.rel (0) target = $region9
  $region8: #{jk_forward.6} parent=0 // pred_region
    _
  $region9: #{jk_forward.6} parent=0 // pred_fallthru
    _
  // Predicated region
  $region10: #{jk_forward.6} parent=0 // pred_check
    _
  $region11: #{jk_forward.6} parent=0 // pred_check_branch
    %17 = sbr.rel (0) target = $region13
  $region12: #{jk_forward.6} parent=0 // pred_region
    _
  $region13: #{jk_forward.6} parent=0 // pred_fallthru
    _
  // Predicated region
  $region14: #{jk_forward.6} parent=0 // pred_check
    _
  $region15: #{jk_forward.6} parent=0 // pred_check_branch
    %19 = sbr.rel (0) target = $region17
  $region16: #{jk_forward.6} parent=0 // pred_region
    _
  $region17: #{jk_forward.6} parent=0 // pred_fallthru
    _
  // Predicated region
  $region18: #{jk_forward.6} parent=0 // pred_check
    _
  $region19: #{jk_forward.6} parent=0 // pred_check_branch
    %21 = sbr.rel (0) target = $region21
  $region20: #{jk_forward.6} parent=0 // pred_region
    _
  $region21: #{jk_forward.6} parent=0 // pred_fallthru
    _
  %p23 = scmp.eq.s32.totalorder 0, 0
  // Predicated region
  $region22: #{jk_forward.6} parent=0 // pred_check
    %p24 = pneg %p23
  $region23: #{jk_forward.6} parent=0 // pred_check_branch
    %26 = sbr.rel (%p24) target = $region25
  $region24: #{jk_forward.6} parent=0 // pred_region
    %27 = vst [vmem:[#allocation2] sm:$0xff] 0.0
    %28 = vst [vmem:[#allocation2 + $0x8] sm:$0xff] 0.0
  $region25: #{jk_forward.6} parent=0 // pred_fallthru
    _
  %s29 = smul.u32 0, 16
  %v30 = vld [vmem:[#allocation2] sm:$0xff]
  %v31 = vld [vmem:[#allocation2 + $0x8] sm:$0xff]
  %v32 = vld [vmem:[%s0] sm:$0xf]
  %v33 = vld [vmem:[%s0 + $0x4] sm:$0xf]
  %s34 = sshra.s32 %s29, 3
  %s35 = sand.u32 %s29, 7
  %s36 = smul.addr %s34, 4
  %s37 = scalar_lea.vmem %s1, %s36
  %v38 = vld [vmem:[%s37] sm:$0xf]
  %v39 = vld [vmem:[%s37 + $0x4] sm:$0xf]
  %v42 = vunpack.c.l.b16 %v32
  %v43 = vunpack.c.l.b16 %v33
  %v44 = vpack.c.b16 %v43, %v42
  %v47 = vunpack.c.l.b16 %v38
  %v48 = vunpack.c.l.b16 %v39
  %v49 = vpack.c.b16 %v48, %v47
  %vm51 = vcmask 130048
  %v53 = vsel %vm51, %v44, 0
  %55 = vmatpush.bf16.msra.mxu0 0
  %56 = vmatpush.bf16.msra.mxu0 0
  %57 = vmatpush.bf16.msra.mxu0 0
  %58 = vmatpush.bf16.msra.mxu0 0
  %59 = vmatpush.bf16.msra.mxu0 0
  %60 = vmatpush.bf16.msra.mxu0 0
  %61 = vmatpush.bf16.msra.mxu0 0
  %62 = vmatpush.bf16.msra.mxu0 %v49
  %63 = vmatmul.bf16.gmra.mxu0 %v53
  %v64 = vpop.f32.mrf.mxu0
  %v65 = vadd.f32 0.0, %v64
  %v66 = vpop.f32.mrf.mxu0
  %v67 = vadd.f32 0.0, %v66
  %68 = vdwg.mxu0
  %v69 = vadd.f32 %v30, %v65
  %v70 = vadd.f32 %v31, %v67
  %71 = vst [vmem:[#allocation2] sm:$0xff] %v69
  %72 = vst [vmem:[#allocation2 + $0x8] sm:$0xff] %v70
  // Predicated region
  $region26: #{jk_forward.6} parent=0 // pred_check
    %p73 = pneg %p23
  $region27: #{jk_forward.6} parent=0 // pred_check_branch
    %75 = sbr.rel (%p73) target = $region29
  $region28: #{jk_forward.6} parent=0 // pred_region
    %v76 = vld [vmem:[#allocation2] sm:$0xff]
    %v77 = vld [vmem:[#allocation2 + $0x8] sm:$0xff]
    %v78 = vld [vmem:[%s3] sm:$0xff]
    %v79 = vld [vmem:[%s3 + $0x8] sm:$0xff]
    %81 = vset.pattern.permute.xlu0 0
    %82 = vperm.xlu0 %81, %v78
    %v83 = vpop.permute.xlu0 %82
    %86 = vset.pattern.permute.xlu0 0
    %87 = vperm.xlu0 %86, %v79
    %v88 = vpop.permute.xlu0 %87
    %v90 = vmul.f32 %v76, %v83
    %v91 = vmul.f32 %v77, %v88
    %v92 = vld [vmem:[%s2] sm:$0x1]
    %v94 = vperm.slane %v92, 0
    %v96 = vadd.f32 %v90, %v94
    %v97 = vadd.f32 %v91, %v94
    %v98 = vmax.f32 %v96, 0.0
    %v99 = vmax.f32 %v97, 0.0
    %v100 = vpack.c.bf16 %v98, %v98
    %v101 = vpack.c.bf16 %v99, %v99
    %102 = vst [vmem:[%s5] sm:$0xf] %v100
    %103 = vst [vmem:[%s5 + $0x4] sm:$0xf] %v101
    %v104 = vld [vmem:[%s4] sm:$0xff]
    %v105 = vld [vmem:[%s4 + $0x8] sm:$0xff]
    %v106 = vmax.f32 %v104, %v98
    %v107 = vmax.f32 %v105, %v99
    %108 = vst [vmem:[%s6] sm:$0xff] %v106
    %109 = vst [vmem:[%s6 + $0x8] sm:$0xff] %v107
  $region29: #{jk_forward.6} parent=0 // pred_fallthru
    _
  // Predicated region
  $region30: #{jk_forward.6} parent=0 // pred_check
    _
  $region31: #{jk_forward.6} parent=0 // pred_check_branch
    %111 = sbr.rel (0) target = $region33
  $region32: #{jk_forward.6} parent=0 // pred_region
    _
  $region33: #{jk_forward.6} parent=0 // pred_fallthru
    _
  // Predicated region
  $region34: #{jk_forward.6} parent=0 // pred_check
    _
  $region35: #{jk_forward.6} parent=0 // pred_check_branch
    %113 = sbr.rel (0) target = $region37
  $region36: #{jk_forward.6} parent=0 // pred_region
    _
  $region37: #{jk_forward.6} parent=0 // pred_fallthru
    _
  // Predicated region
  $region38: #{jk_forward.6} parent=0 // pred_check
    _
  $region39: #{jk_forward.6} parent=0 // pred_check_branch
    %115 = sbr.rel (0) target = $region41
  $region40: #{jk_forward.6} parent=0 // pred_region
    _
  $region41: #{jk_forward.6} parent=0 // pred_fallthru
    _
  // Predicated region
  $region42: #{jk_forward.6} parent=0 // pred_check
    _
  $region43: #{jk_forward.6} parent=0 // pred_check_branch
    %117 = sbr.rel (0) target = $region45
  $region44: #{jk_forward.6} parent=0 // pred_region
    _
  $region45: #{jk_forward.6} parent=0 // pred_fallthru
    _

// kernel: jk_forward.8
$region0: #{jk_forward.8}
  #allocation0 [shape = 'u32[]', space=smem, size = 0x4, offset = 0x4, fixed_abs, tag = 'smem constant byte address 0x4 - core index']
  #allocation1 [shape = 'u32[72,128]{1,0:T(1,128)}', space=vmem, size = 0x9000, scoped, tag = 'internal scratch']
  #allocation2 [shape = 'f32[16,128]{1,0:T(8,128)}', space=vmem, size = 0x2000, scoped, tag = 'scratch operand']
  %s0 = inlined_call_operand.vmem [shape: bf16[16,16], index: 0, kind: input, shape index: {}]
  %s1 = inlined_call_operand.vmem [shape: bf16[16,128], index: 1, kind: input, shape index: {}]
  %s2 = inlined_call_operand.vmem [shape: f32[1,128], index: 2, kind: input, shape index: {}]
  %s3 = inlined_call_operand.vmem [shape: f32[16,1], index: 3, kind: input, shape index: {}]
  %s4 = inlined_call_operand.vmem [shape: f32[16,128], index: 4, kind: input, shape index: {}]
  %s5 = inlined_call_operand.hbm [shape: bf16[16,128], index: 5, kind: output, shape index: {0}]
  %s6 = inlined_call_operand.vmem [shape: f32[16,128], index: 6, kind: output, shape index: {1}]
  %7 = xla_tuple %s5, %s6
  %s8 = sld [smem:[#allocation0]]
  $region46: #{jk_forward.8} parent=0
    _
  %s10 = ssub.s32 1, %s8
  %s11 = scalar_select 0, %s10, %s8
  $region1: #{jk_forward.8} parent=0
    #allocation3 [shape = 'u8[4096]{0}', space=vmem, size = 0x1000, scoped, tag = 'output window, operand 0, single buffered']
    #allocation4 [shape = 's32[1]{0}', space=sflag, size = 0x4, scoped, tag = 'scoped memory for jk_forward.8']
    %12 = vsyncpa [#allocation4], 0
    // Predicated region
    $region2: #{jk_forward.8} parent=1 // pred_check
      _
    $region3: #{jk_forward.8} parent=1 // pred_check_branch
      %14 = sbr.rel (0) target = $region5
    $region4: #{jk_forward.8} parent=1 // pred_region
      _
    $region5: #{jk_forward.8} parent=1 // pred_fallthru
      _
    // Predicated region
    $region6: #{jk_forward.8} parent=1 // pred_check
      _
    $region7: #{jk_forward.8} parent=1 // pred_check_branch
      %16 = sbr.rel (0) target = $region9
    $region8: #{jk_forward.8} parent=1 // pred_region
      _
    $region9: #{jk_forward.8} parent=1 // pred_fallthru
      _
    // Predicated region
    $region10: #{jk_forward.8} parent=1 // pred_check
      _
    $region11: #{jk_forward.8} parent=1 // pred_check_branch
      %18 = sbr.rel (0) target = $region13
    $region12: #{jk_forward.8} parent=1 // pred_region
      _
    $region13: #{jk_forward.8} parent=1 // pred_fallthru
      _
    // Predicated region
    $region14: #{jk_forward.8} parent=1 // pred_check
      _
    $region15: #{jk_forward.8} parent=1 // pred_check_branch
      %20 = sbr.rel (0) target = $region17
    $region16: #{jk_forward.8} parent=1 // pred_region
      _
    $region17: #{jk_forward.8} parent=1 // pred_fallthru
      _
    // Predicated region
    $region18: #{jk_forward.8} parent=1 // pred_check
      _
    $region19: #{jk_forward.8} parent=1 // pred_check_branch
      %22 = sbr.rel (0) target = $region21
    $region20: #{jk_forward.8} parent=1 // pred_region
      _
    $region21: #{jk_forward.8} parent=1 // pred_fallthru
      _
    %p24 = scmp.eq.s32.totalorder 0, 0
    // Predicated region
    $region22: #{jk_forward.8} parent=1 // pred_check
      %p25 = pneg %p24
    $region23: #{jk_forward.8} parent=1 // pred_check_branch
      %27 = sbr.rel (%p25) target = $region25
    $region24: #{jk_forward.8} parent=1 // pred_region
      %28 = vst [vmem:[#allocation2] sm:$0xff] 0.0
      %29 = vst [vmem:[#allocation2 + $0x8] sm:$0xff] 0.0
    $region25: #{jk_forward.8} parent=1 // pred_fallthru
      _
    %s30 = smul.u32 0, 16
    %v31 = vld [vmem:[#allocation2] sm:$0xff]
    %v32 = vld [vmem:[#allocation2 + $0x8] sm:$0xff]
    %v33 = vld [vmem:[%s0] sm:$0xf]
    %v34 = vld [vmem:[%s0 + $0x4] sm:$0xf]
    %s35 = sshra.s32 %s30, 3
    %s36 = sand.u32 %s30, 7
    %s37 = smul.addr %s35, 4
    %s38 = scalar_lea.vmem %s1, %s37
    %v39 = vld [vmem:[%s38] sm:$0xf]
    %v40 = vld [vmem:[%s38 + $0x4] sm:$0xf]
    %v43 = vunpack.c.l.b16 %v33
    %v44 = vunpack.c.l.b16 %v34
    %v45 = vpack.c.b16 %v44, %v43
    %v48 = vunpack.c.l.b16 %v39
    %v49 = vunpack.c.l.b16 %v40
    %v50 = vpack.c.b16 %v49, %v48
    %vm52 = vcmask 130048
    %v54 = vsel %vm52, %v45, 0
    %56 = vmatpush.bf16.msra.mxu0 0
    %57 = vmatpush.bf16.msra.mxu0 0
    %58 = vmatpush.bf16.msra.mxu0 0
    %59 = vmatpush.bf16.msra.mxu0 0
    %60 = vmatpush.bf16.msra.mxu0 0
    %61 = vmatpush.bf16.msra.mxu0 0
    %62 = vmatpush.bf16.msra.mxu0 0
    %63 = vmatpush.bf16.msra.mxu0 %v50
    %64 = vmatmul.bf16.gmra.mxu0 %v54
    %v65 = vpop.f32.mrf.mxu0
    %v66 = vadd.f32 0.0, %v65
    %v67 = vpop.f32.mrf.mxu0
    %v68 = vadd.f32 0.0, %v67
    %69 = vdwg.mxu0
    %v70 = vadd.f32 %v31, %v66
    %v71 = vadd.f32 %v32, %v68
    %72 = vst [vmem:[#allocation2] sm:$0xff] %v70
    %73 = vst [vmem:[#allocation2 + $0x8] sm:$0xff] %v71
    // Predicated region
    $region26: #{jk_forward.8} parent=1 // pred_check
      %p74 = pneg %p24
    $region27: #{jk_forward.8} parent=1 // pred_check_branch
      %76 = sbr.rel (%p74) target = $region29
    $region28: #{jk_forward.8} parent=1 // pred_region
      %v77 = vld [vmem:[#allocation2] sm:$0xff]
      %v78 = vld [vmem:[#allocation2 + $0x8] sm:$0xff]
      %v79 = vld [vmem:[%s3] sm:$0xff]
      %v80 = vld [vmem:[%s3 + $0x8] sm:$0xff]
      %82 = vset.pattern.permute.xlu0 0
      %83 = vperm.xlu0 %82, %v79
      %v84 = vpop.permute.xlu0 %83
      %87 = vset.pattern.permute.xlu0 0
      %88 = vperm.xlu0 %87, %v80
      %v89 = vpop.permute.xlu0 %88
      %v91 = vmul.f32 %v77, %v84
      %v92 = vmul.f32 %v78, %v89
      %v93 = vld [vmem:[%s2] sm:$0x1]
      %v95 = vperm.slane %v93, 0
      %v97 = vadd.f32 %v91, %v95
      %v98 = vadd.f32 %v92, %v95
      %v99 = vmax.f32 %v97, 0.0
      %v100 = vmax.f32 %v98, 0.0
      %v101 = vpack.c.bf16 %v99, %v99
      %v102 = vpack.c.bf16 %v100, %v100
      %103 = vst [vmem:[#allocation3] sm:$0xf] %v101
      %104 = vst [vmem:[#allocation3 + $0x4] sm:$0xf] %v102
      %v105 = vld [vmem:[%s4] sm:$0xff]
      %v106 = vld [vmem:[%s4 + $0x8] sm:$0xff]
      %v107 = vmax.f32 %v105, %v99
      %v108 = vmax.f32 %v106, %v100
      %109 = vst [vmem:[%s6] sm:$0xff] %v107
      %110 = vst [vmem:[%s6 + $0x8] sm:$0xff] %v108
    $region29: #{jk_forward.8} parent=1 // pred_fallthru
      _
    // Predicated region
    $region30: #{jk_forward.8} parent=1 // pred_check
      _
    $region31: #{jk_forward.8} parent=1 // pred_check_branch
      %112 = sbr.rel (0) target = $region33
    $region32: #{jk_forward.8} parent=1 // pred_region
      %114 = vsyncadd [#allocation4], 0
      %s115 = sshll.u32 [#allocation3], 4
      %s116 = int_to_ptr.vmem [resolvable:$true] %s115
      %s117 = sshll.u32 %s5, 4
      %s118 = int_to_ptr.hbm [resolvable:$true] %s117
      %123 = dma.vmem_to_hbm [thread:$0]  %s116, 128, %s118, [#allocation4], 64, 64, 4
    $region33: #{jk_forward.8} parent=1 // pred_fallthru
      _
    // Predicated region
    $region34: #{jk_forward.8} parent=1 // pred_check
      _
    $region35: #{jk_forward.8} parent=1 // pred_check_branch
      %125 = sbr.rel (0) target = $region37
    $region36: #{jk_forward.8} parent=1 // pred_region
      _
    $region37: #{jk_forward.8} parent=1 // pred_fallthru
      _
    // Predicated region
    $region38: #{jk_forward.8} parent=1 // pred_check
      _
    $region39: #{jk_forward.8} parent=1 // pred_check_branch
      %127 = sbr.rel (0) target = $region41
    $region40: #{jk_forward.8} parent=1 // pred_region
      %129 = dma.done [#allocation4], 128
    $region41: #{jk_forward.8} parent=1 // pred_fallthru
      _
    // Predicated region
    $region42: #{jk_forward.8} parent=1 // pred_check
      _
    $region43: #{jk_forward.8} parent=1 // pred_check_branch
      %131 = sbr.rel (0) target = $region45
    $region44: #{jk_forward.8} parent=1 // pred_region
      _
    $region45: #{jk_forward.8} parent=1 // pred_fallthru
      _
    %132 = vsyncpa [#allocation4], 1

// kernel: jk_forward.9
$region0: #{jk_forward.9}
  #allocation0 [shape = 'u32[]', space=smem, size = 0x4, offset = 0x4, fixed_abs, tag = 'smem constant byte address 0x4 - core index']
  #allocation1 [shape = 'u32[72,128]{1,0:T(1,128)}', space=vmem, size = 0x9000, scoped, tag = 'internal scratch']
  #allocation2 [shape = 'f32[8,128]{1,0:T(8,128)}', space=vmem, size = 0x1000, scoped, tag = 'scratch operand']
  %s0 = inlined_call_operand.vmem [shape: f32[16,128], index: 0, kind: input, shape index: {}]
  %s1 = inlined_call_operand.vmem [shape: s32[16,1], index: 1, kind: input, shape index: {}]
  %s2 = inlined_call_operand.vmem [shape: f32[128,128], index: 2, kind: input, shape index: {}]
  %s3 = inlined_call_operand.vmem [shape: f32[1,128], index: 3, kind: input, shape index: {}]
  %s4 = inlined_call_operand.vmem [shape: f32[128,128], index: 4, kind: input, shape index: {}]
  %s5 = inlined_call_operand.vmem [shape: f32[1,128], index: 5, kind: input, shape index: {}]
  %s6 = inlined_call_operand.vmem [shape: f32[8,128], index: 6, kind: output, shape index: {}]
  %s7 = sld [smem:[#allocation0]]
  $region42: #{jk_forward.9} parent=0
    _
  %s9 = ssub.s32 1, %s7
  %s10 = scalar_select 0, %s9, %s7
  // Predicated region
  $region2: #{jk_forward.9} parent=0 // pred_check
    _
  $region3: #{jk_forward.9} parent=0 // pred_check_branch
    %12 = sbr.rel (0) target = $region5
  $region4: #{jk_forward.9} parent=0 // pred_region
    _
  $region5: #{jk_forward.9} parent=0 // pred_fallthru
    _
  // Predicated region
  $region6: #{jk_forward.9} parent=0 // pred_check
    _
  $region7: #{jk_forward.9} parent=0 // pred_check_branch
    %14 = sbr.rel (0) target = $region9
  $region8: #{jk_forward.9} parent=0 // pred_region
    _
  $region9: #{jk_forward.9} parent=0 // pred_fallthru
    _
  // Predicated region
  $region10: #{jk_forward.9} parent=0 // pred_check
    _
  $region11: #{jk_forward.9} parent=0 // pred_check_branch
    %16 = sbr.rel (0) target = $region13
  $region12: #{jk_forward.9} parent=0 // pred_region
    _
  $region13: #{jk_forward.9} parent=0 // pred_fallthru
    _
  // Predicated region
  $region14: #{jk_forward.9} parent=0 // pred_check
    _
  $region15: #{jk_forward.9} parent=0 // pred_check_branch
    %18 = sbr.rel (0) target = $region17
  $region16: #{jk_forward.9} parent=0 // pred_region
    _
  $region17: #{jk_forward.9} parent=0 // pred_fallthru
    _
  // Predicated region
  $region18: #{jk_forward.9} parent=0 // pred_check
    _
  $region19: #{jk_forward.9} parent=0 // pred_check_branch
    %20 = sbr.rel (0) target = $region21
  $region20: #{jk_forward.9} parent=0 // pred_region
    _
  $region21: #{jk_forward.9} parent=0 // pred_fallthru
    _
  // Predicated region
  $region22: #{jk_forward.9} parent=0 // pred_check
    _
  $region23: #{jk_forward.9} parent=0 // pred_check_branch
    %22 = sbr.rel (0) target = $region25
  $region24: #{jk_forward.9} parent=0 // pred_region
    _
  $region25: #{jk_forward.9} parent=0 // pred_fallthru
    _
  %p23 = scmp.eq.s32.totalorder 0, 0
  // Predicated region
  $region26: #{jk_forward.9} parent=0 // pred_check
    %p24 = pneg %p23
  $region27: #{jk_forward.9} parent=0 // pred_check_branch
    %26 = sbr.rel (%p24) target = $region29
  $region28: #{jk_forward.9} parent=0 // pred_region
    %27 = vst [vmem:[#allocation2] sm:$0xff] -1e+30
  $region29: #{jk_forward.9} parent=0 // pred_fallthru
    _
  %v28 = vld [vmem:[%s0] sm:$0xff]
  %v29 = vld [vmem:[%s0 + $0x8] sm:$0xff]
  %v30 = vld [vmem:[%s1] sm:$0xff]
  %v31 = vld [vmem:[%s1 + $0x8] sm:$0xff]
  %vm32 = vcmp.eq.s32.totalorder %v30, 0
  %vm33 = vcmp.eq.s32.totalorder %v31, 0
  %vm34 = vcmp.eq.s32.totalorder %v30, 1
  %vm35 = vcmp.eq.s32.totalorder %v31, 1
  %vm36 = vcmp.eq.s32.totalorder %v30, 2
  %vm37 = vcmp.eq.s32.totalorder %v31, 2
  %vm38 = vcmp.eq.s32.totalorder %v30, 3
  %vm39 = vcmp.eq.s32.totalorder %v31, 3
  %vm40 = vcmp.eq.s32.totalorder %v30, 4
  %vm41 = vcmp.eq.s32.totalorder %v31, 4
  %vm42 = vcmp.eq.s32.totalorder %v30, 5
  %vm43 = vcmp.eq.s32.totalorder %v31, 5
  %vm44 = vcmp.eq.s32.totalorder %v30, 6
  %vm45 = vcmp.eq.s32.totalorder %v31, 6
  %vm46 = vcmp.eq.s32.totalorder %v30, 7
  %vm47 = vcmp.eq.s32.totalorder %v31, 7
  %v48 = vsel %vm32, 1, 0
  %v49 = vsel %vm33, 1, 0
  %v50 = vsel %vm34, 1, 0
  %v51 = vsel %vm35, 1, 0
  %v52 = vsel %vm36, 1, 0
  %v53 = vsel %vm37, 1, 0
  %v54 = vsel %vm38, 1, 0
  %v55 = vsel %vm39, 1, 0
  %v56 = vsel %vm40, 1, 0
  %v57 = vsel %vm41, 1, 0
  %v58 = vsel %vm42, 1, 0
  %v59 = vsel %vm43, 1, 0
  %v60 = vsel %vm44, 1, 0
  %v61 = vsel %vm45, 1, 0
  %v62 = vsel %vm46, 1, 0
  %v63 = vsel %vm47, 1, 0
  %64 = vset.pattern.permute.xlu0 0
  %65 = vperm.xlu0 %64, %v48
  %v66 = vpop.permute.xlu0 %65
  %67 = vset.pattern.permute.xlu0 0
  %68 = vperm.xlu0 %67, %v49
  %v69 = vpop.permute.xlu0 %68
  %70 = vset.pattern.permute.xlu0 0
  %71 = vperm.xlu0 %70, %v50
  %v72 = vpop.permute.xlu0 %71
  %73 = vset.pattern.permute.xlu0 0
  %74 = vperm.xlu0 %73, %v51
  %v75 = vpop.permute.xlu0 %74
  %76 = vset.pattern.permute.xlu0 0
  %77 = vperm.xlu0 %76, %v52
  %v78 = vpop.permute.xlu0 %77
  %79 = vset.pattern.permute.xlu0 0
  %80 = vperm.xlu0 %79, %v53
  %v81 = vpop.permute.xlu0 %80
  %82 = vset.pattern.permute.xlu0 0
  %83 = vperm.xlu0 %82, %v54
  %v84 = vpop.permute.xlu0 %83
  %85 = vset.pattern.permute.xlu0 0
  %86 = vperm.xlu0 %85, %v55
  %v87 = vpop.permute.xlu0 %86
  %88 = vset.pattern.permute.xlu0 0
  %89 = vperm.xlu0 %88, %v56
  %v90 = vpop.permute.xlu0 %89
  %91 = vset.pattern.permute.xlu0 0
  %92 = vperm.xlu0 %91, %v57
  %v93 = vpop.permute.xlu0 %92
  %94 = vset.pattern.permute.xlu0 0
  %95 = vperm.xlu0 %94, %v58
  %v96 = vpop.permute.xlu0 %95
  %97 = vset.pattern.permute.xlu0 0
  %98 = vperm.xlu0 %97, %v59
  %v99 = vpop.permute.xlu0 %98
  %100 = vset.pattern.permute.xlu0 0
  %101 = vperm.xlu0 %100, %v60
  %v102 = vpop.permute.xlu0 %101
  %103 = vset.pattern.permute.xlu0 0
  %104 = vperm.xlu0 %103, %v61
  %v105 = vpop.permute.xlu0 %104
  %106 = vset.pattern.permute.xlu0 0
  %107 = vperm.xlu0 %106, %v62
  %v108 = vpop.permute.xlu0 %107
  %109 = vset.pattern.permute.xlu0 0
  %110 = vperm.xlu0 %109, %v63
  %v111 = vpop.permute.xlu0 %110
  %vm112 = vcmp.eq.s32.totalorder %v66, 1
  %vm113 = vcmp.eq.s32.totalorder %v69, 1
  %vm114 = vcmp.eq.s32.totalorder %v72, 1
  %vm115 = vcmp.eq.s32.totalorder %v75, 1
  %vm116 = vcmp.eq.s32.totalorder %v78, 1
  %vm117 = vcmp.eq.s32.totalorder %v81, 1
  %vm118 = vcmp.eq.s32.totalorder %v84, 1
  %vm119 = vcmp.eq.s32.totalorder %v87, 1
  %vm120 = vcmp.eq.s32.totalorder %v90, 1
  %vm121 = vcmp.eq.s32.totalorder %v93, 1
  %vm122 = vcmp.eq.s32.totalorder %v96, 1
  %vm123 = vcmp.eq.s32.totalorder %v99, 1
  %vm124 = vcmp.eq.s32.totalorder %v102, 1
  %vm125 = vcmp.eq.s32.totalorder %v105, 1
  %vm126 = vcmp.eq.s32.totalorder %v108, 1
  %vm127 = vcmp.eq.s32.totalorder %v111, 1
  %v128 = vsel %vm112, %v28, -1e+30
  %v129 = vsel %vm113, %v29, -1e+30
  %v130 = vsel %vm114, %v28, -1e+30
  %v131 = vsel %vm115, %v29, -1e+30
  %v132 = vsel %vm116, %v28, -1e+30
  %v133 = vsel %vm117, %v29, -1e+30
  %v134 = vsel %vm118, %v28, -1e+30
  %v135 = vsel %vm119, %v29, -1e+30
  %v136 = vsel %vm120, %v28, -1e+30
  %v137 = vsel %vm121, %v29, -1e+30
  %v138 = vsel %vm122, %v28, -1e+30
  %v139 = vsel %vm123, %v29, -1e+30
  %v140 = vsel %vm124, %v28, -1e+30
  %v141 = vsel %vm125, %v29, -1e+30
  %v142 = vsel %vm126, %v28, -1e+30
  %v143 = vsel %vm127, %v29, -1e+30
  %v144 = vld [vmem:[#allocation2] sm:$0xff]
  %v145 = vmax.f32 %v128, %v129
  %v146 = vrot.slane %v145, 4
  %v147 = vmax.f32 %v145, %v146
  %v148 = vrot.slane %v147, 2
  %v149 = vmax.f32 %v147, %v148
  %v150 = vrot.slane %v149, 1
  %v151 = vmax.f32 %v149, %v150
  %v152 = vmax.f32 %v130, %v131
  %v153 = vrot.slane %v152, 4
  %v154 = vmax.f32 %v152, %v153
  %v155 = vrot.slane %v154, 2
  %v156 = vmax.f32 %v154, %v155
  %v157 = vrot.slane %v156, 1
  %v158 = vmax.f32 %v156, %v157
  %v159 = vmax.f32 %v132, %v133
  %v160 = vrot.slane %v159, 4
  %v161 = vmax.f32 %v159, %v160
  %v162 = vrot.slane %v161, 2
  %v163 = vmax.f32 %v161, %v162
  %v164 = vrot.slane %v163, 1
  %v165 = vmax.f32 %v163, %v164
  %v166 = vmax.f32 %v134, %v135
  %v167 = vrot.slane %v166, 4
  %v168 = vmax.f32 %v166, %v167
  %v169 = vrot.slane %v168, 2
  %v170 = vmax.f32 %v168, %v169
  %v171 = vrot.slane %v170, 1
  %v172 = vmax.f32 %v170, %v171
  %v173 = vmax.f32 %v136, %v137
  %v174 = vrot.slane %v173, 4
  %v175 = vmax.f32 %v173, %v174
  %v176 = vrot.slane %v175, 2
  %v177 = vmax.f32 %v175, %v176
  %v178 = vrot.slane %v177, 1
  %v179 = vmax.f32 %v177, %v178
  %v180 = vmax.f32 %v138, %v139
  %v181 = vrot.slane %v180, 4
  %v182 = vmax.f32 %v180, %v181
  %v183 = vrot.slane %v182, 2
  %v184 = vmax.f32 %v182, %v183
  %v185 = vrot.slane %v184, 1
  %v186 = vmax.f32 %v184, %v185
  %v187 = vmax.f32 %v140, %v141
  %v188 = vrot.slane %v187, 4
  %v189 = vmax.f32 %v187, %v188
  %v190 = vrot.slane %v189, 2
  %v191 = vmax.f32 %v189, %v190
  %v192 = vrot.slane %v191, 1
  %v193 = vmax.f32 %v191, %v192
  %v194 = vmax.f32 %v142, %v143
  %v195 = vrot.slane %v194, 4
  %v196 = vmax.f32 %v194, %v195
  %v197 = vrot.slane %v196, 2
  %v198 = vmax.f32 %v196, %v197
  %v199 = vrot.slane %v198, 1
  %v200 = vmax.f32 %v198, %v199
  %vm209 = vcmask 1041409
  %v210 = vsel %vm209, %v158, %v151
  %vm211 = vcmask 1042434
  %v212 = vsel %vm211, %v165, %v210
  %vm213 = vcmask 1043459
  %v214 = vsel %vm213, %v172, %v212
  %vm215 = vcmask 1044484
  %v216 = vsel %vm215, %v179, %v214
  %vm217 = vcmask 1045509
  %v218 = vsel %vm217, %v186, %v216
  %vm219 = vcmask 1046534
  %v220 = vsel %vm219, %v193, %v218
  %vm221 = vcmask 1047559
  %v222 = vsel %vm221, %v200, %v220
  %v224 = vmax.f32 %v144, %v222
  %225 = vst [vmem:[#allocation2] sm:$0xff] %v224
  // Predicated region
  $region30: #{jk_forward.9} parent=0 // pred_check
    %p226 = pneg %p23
  $region31: #{jk_forward.9} parent=0 // pred_check_branch
    %228 = sbr.rel (%p226) target = $region33
  $region32: #{jk_forward.9} parent=0 // pred_region
    %v229 = vld [vmem:[#allocation2] sm:$0xff]
    %vm230 = vcmp.gt.f32.partialorder %v229, -1e+29
    %v231 = vsel %vm230, %v229, 0.0
    %v232 = vld [vmem:[%s2] sm:$0xff]
    %v233 = vld [vmem:[%s2 + $0x8] sm:$0xff]
    %v234 = vld [vmem:[%s2 + $0x10] sm:$0xff]
    %v235 = vld [vmem:[%s2 + $0x18] sm:$0xff]
    %v236 = vld [vmem:[%s2 + $0x20] sm:$0xff]
    %v237 = vld [vmem:[%s2 + $0x28] sm:$0xff]
    %v238 = vld [vmem:[%s2 + $0x30] sm:$0xff]
    %v239 = vld [vmem:[%s2 + $0x38] sm:$0xff]
    %v240 = vld [vmem:[%s2 + $0x40] sm:$0xff]
    %v241 = vld [vmem:[%s2 + $0x48] sm:$0xff]
    %v242 = vld [vmem:[%s2 + $0x50] sm:$0xff]
    %v243 = vld [vmem:[%s2 + $0x58] sm:$0xff]
    %v244 = vld [vmem:[%s2 + $0x60] sm:$0xff]
    %v245 = vld [vmem:[%s2 + $0x68] sm:$0xff]
    %v246 = vld [vmem:[%s2 + $0x70] sm:$0xff]
    %v247 = vld [vmem:[%s2 + $0x78] sm:$0xff]
    %v248 = vld [vmem:[%s3] sm:$0x1]
    %v250 = vperm.slane %v248, 0
    %252 = vmatpush.msra.mxu0 %v247
    %253 = vmatpush.msra.mxu0 %v246
    %254 = vmatpush.msra.mxu0 %v245
    %255 = vmatpush.msra.mxu0 %v244
    %256 = vmatpush.msra.mxu0 %v243
    %257 = vmatpush.msra.mxu0 %v242
    %258 = vmatpush.msra.mxu0 %v241
    %259 = vmatpush.msra.mxu0 %v240
    %260 = vmatpush.msra.mxu0 %v239
    %261 = vmatpush.msra.mxu0 %v238
    %262 = vmatpush.msra.mxu0 %v237
    %263 = vmatpush.msra.mxu0 %v236
    %264 = vmatpush.msra.mxu0 %v235
    %265 = vmatpush.msra.mxu0 %v234
    %266 = vmatpush.msra.mxu0 %v233
    %267 = vmatpush.msra.mxu0 %v232
    %268 = vmatmul.f32.gmra.mxu0 %v231
    %v269 = vpop.f32.mrf.mxu0
    %v270 = vadd.f32 %v250, %v269
    %271 = vdwg.mxu0
    %v272 = vmax.f32 %v270, 0.0
    %v273 = vld [vmem:[%s4] sm:$0xff]
    %v274 = vld [vmem:[%s4 + $0x8] sm:$0xff]
    %v275 = vld [vmem:[%s4 + $0x10] sm:$0xff]
    %v276 = vld [vmem:[%s4 + $0x18] sm:$0xff]
    %v277 = vld [vmem:[%s4 + $0x20] sm:$0xff]
    %v278 = vld [vmem:[%s4 + $0x28] sm:$0xff]
    %v279 = vld [vmem:[%s4 + $0x30] sm:$0xff]
    %v280 = vld [vmem:[%s4 + $0x38] sm:$0xff]
    %v281 = vld [vmem:[%s4 + $0x40] sm:$0xff]
    %v282 = vld [vmem:[%s4 + $0x48] sm:$0xff]
    %v283 = vld [vmem:[%s4 + $0x50] sm:$0xff]
    %v284 = vld [vmem:[%s4 + $0x58] sm:$0xff]
    %v285 = vld [vmem:[%s4 + $0x60] sm:$0xff]
    %v286 = vld [vmem:[%s4 + $0x68] sm:$0xff]
    %v287 = vld [vmem:[%s4 + $0x70] sm:$0xff]
    %v288 = vld [vmem:[%s4 + $0x78] sm:$0xff]
    %v289 = vld [vmem:[%s5] sm:$0x1]
    %v291 = vperm.slane %v289, 0
    %293 = vmatpush.msra.mxu0 %v288
    %294 = vmatpush.msra.mxu0 %v287
    %295 = vmatpush.msra.mxu0 %v286
    %296 = vmatpush.msra.mxu0 %v285
    %297 = vmatpush.msra.mxu0 %v284
    %298 = vmatpush.msra.mxu0 %v283
    %299 = vmatpush.msra.mxu0 %v282
    %300 = vmatpush.msra.mxu0 %v281
    %301 = vmatpush.msra.mxu0 %v280
    %302 = vmatpush.msra.mxu0 %v279
    %303 = vmatpush.msra.mxu0 %v278
    %304 = vmatpush.msra.mxu0 %v277
    %305 = vmatpush.msra.mxu0 %v276
    %306 = vmatpush.msra.mxu0 %v275
    %307 = vmatpush.msra.mxu0 %v274
    %308 = vmatpush.msra.mxu0 %v273
    %309 = vmatmul.f32.gmra.mxu0 %v272
    %v310 = vpop.f32.mrf.mxu0
    %v311 = vadd.f32 %v291, %v310
    %312 = vdwg.mxu0
    %313 = vst [vmem:[%s6] sm:$0xff] %v311
  $region33: #{jk_forward.9} parent=0 // pred_fallthru
    _
  // Predicated region
  $region34: #{jk_forward.9} parent=0 // pred_check
    _
  $region35: #{jk_forward.9} parent=0 // pred_check_branch
    %315 = sbr.rel (0) target = $region37
  $region36: #{jk_forward.9} parent=0 // pred_region
    _
  $region37: #{jk_forward.9} parent=0 // pred_fallthru
    _
  // Predicated region
  $region38: #{jk_forward.9} parent=0 // pred_check
    _
  $region39: #{jk_forward.9} parent=0 // pred_check_branch
    %317 = sbr.rel (0) target = $region41
  $region40: #{jk_forward.9} parent=0 // pred_region
    _
  $region41: #{jk_forward.9} parent=0 // pred_fallthru
    _

</llo_original>
